<compile_context>
chip_gen: v7x
topology: tpu7x:2x2x1
jax: 0.10.0
libtpu: 0.0.40
codegen_flags: <defaults>
</compile_context>

<pallas_src>
import jax
import jax.numpy as jnp
from jax.experimental import pallas as pl
from jax.experimental.pallas import tpu as pltpu


def _edge_linear_kernel(x_ref, wt_ref, shift_ref, o_ref):
    # x_ref:     (tile_n, in_f)      VMEM (f32 or bf16)
    # wt_ref:    (in_f, out_pad)     VMEM (scale-folded weight, f32 or bf16)
    # shift_ref: (1, out_pad)        VMEM (f32, bias+BN shift folded)
    # o_ref:     (tile_n, out_pad)
    y = jnp.dot(x_ref[...], wt_ref[...], preferred_element_type=jnp.float32)
    y = y + shift_ref[...]                 # folded Linear bias + BN affine
    y = jnp.where(y >= 0, y, 0.01 * y)     # leaky_relu, negative_slope=0.01
    o_ref[...] = y.astype(o_ref.dtype)


def edge_linear_forward(x, weight, bias, bn_gamma, bn_beta, bn_mean, bn_var,
                        eps=1e-5, *, tile_n=None, use_bf16_inputs=False,
                        out_dtype=None):
    """x: (N, in_features). weight: (out_features, in_features) as in nn.Linear.

    Returns (N, out_features), or None for N == 0 (matches the PyTorch module).
    """
    if x.shape[0] == 0:
        return None  # matches the PyTorch module's early return

    n, in_f = x.shape
    out_f = weight.shape[0]
    if out_dtype is None:
        out_dtype = jnp.float32

    # ---- Fold BatchNorm(eval) + Linear bias into weight / shift (JAX glue) ----
    # y = (x @ W^T + b) * scale + (beta - mean*scale)
    #   =  x @ (W^T * scale) + (b*scale + beta - mean*scale)
    scale = (bn_gamma / jnp.sqrt(bn_var + eps)).astype(jnp.float32)
    shift = (bn_beta - bn_mean * scale + bias * scale).astype(jnp.float32)
    wt = weight.T.astype(jnp.float32) * scale[None, :]          # (in_f, out_f)

    # ---- Lane-dense output: pad out_features to a multiple of 128 ----
    LANES = 128
    out_pad = pl.cdiv(out_f, LANES) * LANES
    if out_pad != out_f:
        wt = jnp.pad(wt, ((0, 0), (0, out_pad - out_f)))
        shift = jnp.pad(shift, ((0, out_pad - out_f),))
    shift = shift.reshape(1, out_pad)

    # ---- Row tile: single resident block for small N, else 512-row tiles ----
    if tile_n is None:
        if n <= 1024:
            tile_n = max(8, pl.cdiv(n, 8) * 8)   # one block, one DMA in/out
        else:
            tile_n = 512
    n_pad = pl.cdiv(n, tile_n) * tile_n
    if n_pad != n:
        x = jnp.pad(x, ((0, n_pad - n), (0, 0)))

    # ---- Optional bf16 matmul inputs (v6e/v7x); epilogue stays f32 ----
    if use_bf16_inputs:
        x = x.astype(jnp.bfloat16)
        wt = wt.astype(jnp.bfloat16)
    else:
        x = x.astype(jnp.float32)

    out = pl.pallas_call(
        _edge_linear_kernel,
        out_shape=jax.ShapeDtypeStruct((n_pad, out_pad), out_dtype),
        grid_spec=pltpu.PrefetchScalarGridSpec(
            num_scalar_prefetch=0,
            grid=(n_pad // tile_n,),
            in_specs=[
                pl.BlockSpec((tile_n, in_f), lambda i: (i, 0)),
                pl.BlockSpec((in_f, out_pad), lambda i: (0, 0)),
                pl.BlockSpec((1, out_pad), lambda i: (0, 0)),
            ],
            out_specs=pl.BlockSpec((tile_n, out_pad), lambda i: (i, 0)),
        ),
        compiler_params=pltpu.CompilerParams(
            dimension_semantics=("parallel",),   # lets v7x shard rows over 2 TCs
            vmem_limit_bytes=32 << 20),          # safe on v7x's 64 MiB VMEM
    )(x, wt, shift)

    return out[:n, :out_f]


def _reference(x, weight, bias, bn_gamma, bn_beta, bn_mean, bn_var, eps=1e-5):
    y = x @ weight.T + bias
    y = (y - bn_mean) / jnp.sqrt(bn_var + eps) * bn_gamma + bn_beta
    return jnp.where(y >= 0, y, 0.01 * y)


if __name__ == "__main__":
    # Small shapes consistent with the module: N edges x in_lin features.
    IN_LIN, OUT_LIN = 32, 32

    key = jax.random.PRNGKey(0)
    kx, kw, kb, kg, kbeta, km, kv, kx2 = jax.random.split(key, 8)

    weight = jax.random.normal(kw, (OUT_LIN, IN_LIN), dtype=jnp.float32) * 0.1
    bias = jax.random.normal(kb, (OUT_LIN,), dtype=jnp.float32) * 0.1
    bn_gamma = 1.0 + 0.1 * jax.random.normal(kg, (OUT_LIN,), dtype=jnp.float32)
    bn_beta = 0.1 * jax.random.normal(kbeta, (OUT_LIN,), dtype=jnp.float32)
    bn_mean = 0.1 * jax.random.normal(km, (OUT_LIN,), dtype=jnp.float32)
    bn_var = jnp.abs(jax.random.normal(kv, (OUT_LIN,), dtype=jnp.float32)) + 0.5

    # --- Test 1: tiny N (single resident block path) ---
    N = 8
    x = jax.random.normal(kx, (N, IN_LIN), dtype=jnp.float32)
    out = edge_linear_forward(x, weight, bias, bn_gamma, bn_beta, bn_mean, bn_var)
    out = jax.block_until_ready(out)
    ref = _reference(x, weight, bias, bn_gamma, bn_beta, bn_mean, bn_var)
    assert out.shape == (N, OUT_LIN)
    assert jnp.allclose(out, ref, atol=1e-5, rtol=1e-5), "mismatch vs reference (N=8)"

    # --- Test 2: multi-step grid with row + lane padding exercised ---
    N2 = 300
    x2 = jax.random.normal(kx2, (N2, IN_LIN), dtype=jnp.float32)
    out2 = edge_linear_forward(x2, weight, bias, bn_gamma, bn_beta, bn_mean,
                               bn_var, tile_n=128)
    out2 = jax.block_until_ready(out2)
    ref2 = _reference(x2, weight, bias, bn_gamma, bn_beta, bn_mean, bn_var)
    assert out2.shape == (N2, OUT_LIN)
    assert jnp.allclose(out2, ref2, atol=1e-5, rtol=1e-5), "mismatch vs reference (N=300)"

    # --- Test 3: bf16 matmul-input fast path (looser tolerance) ---
    out3 = edge_linear_forward(x2, weight, bias, bn_gamma, bn_beta, bn_mean,
                               bn_var, tile_n=128, use_bf16_inputs=True)
    out3 = jax.block_until_ready(out3)
    assert jnp.allclose(out3, ref2, atol=3e-2, rtol=3e-2), "mismatch vs reference (bf16)"

    # --- Empty-input path (module returns None) ---
    assert edge_linear_forward(jnp.zeros((0, IN_LIN), jnp.float32), weight, bias,
                               bn_gamma, bn_beta, bn_mean, bn_var) is None

    # TODO(synk): training-mode BatchNorm (batch statistics + running-stat update)
    # is not implemented; this kernel covers the eval / folded-affine path.

    print("KERNEL_OK")
</pallas_src>

<mosaic_0001>
module attributes {stable_mosaic.version = 11 : i64} {
  func.func @_edge_linear_kernel(%arg0: i32, %arg1: memref<8x32xf32, #tpu.memory_space<vmem>>, %arg2: memref<32x128xf32, #tpu.memory_space<vmem>>, %arg3: memref<1x128xf32, #tpu.memory_space<vmem>>, %arg4: memref<8x128xf32, #tpu.memory_space<vmem>>) attributes {dimension_semantics = [#tpu.dimension_semantics<parallel>], iteration_bounds = array<i64: 1>, scalar_prefetch = 0 : i64, scratch_operands = 0 : i64, tpu.core_type = #tpu.core_type<tc>, window_params = [{transform_indices = @transform_0, window_bounds = array<i64: 8, 32>}, {pipeline_mode = #tpu.pipeline_mode<synchronous>, transform_indices = @transform_1, window_bounds = array<i64: 32, 128>}, {pipeline_mode = #tpu.pipeline_mode<synchronous>, transform_indices = @transform_2, window_bounds = array<i64: 1, 128>}, {transform_indices = @transform_3, window_bounds = array<i64: 8, 128>}]} {
    %c0 = arith.constant 0 : index
    %c0_0 = arith.constant 0 : index
    %0 = vector.load %arg1[%c0, %c0_0] : memref<8x32xf32, #tpu.memory_space<vmem>>, vector<8x32xf32>
    %c0_1 = arith.constant 0 : index
    %c0_2 = arith.constant 0 : index
    %1 = vector.load %arg2[%c0_1, %c0_2] : memref<32x128xf32, #tpu.memory_space<vmem>>, vector<32x128xf32>
    %cst = arith.constant dense<0.000000e+00> : vector<8x128xf32>
    %2 = tpu.matmul %0, %1, %cst {dimension_numbers = #tpu.dot_dimension_numbers<[1], [0], [0], [1], [0, 0, 1, 1], [], []>} : vector<8x32xf32>, vector<32x128xf32>, vector<8x128xf32> -> vector<8x128xf32>
    %c0_3 = arith.constant 0 : index
    %c0_4 = arith.constant 0 : index
    %3 = vector.load %arg3[%c0_3, %c0_4] : memref<1x128xf32, #tpu.memory_space<vmem>>, vector<1x128xf32>
    %4 = vector.broadcast %3 : vector<1x128xf32> to vector<8x128xf32>
    %5 = arith.addf %2, %4 : vector<8x128xf32>
    %cst_5 = arith.constant 0.000000e+00 : f32
    %6 = vector.broadcast %cst_5 : f32 to vector<8x128xf32>
    %7 = arith.cmpf oge, %5, %6 : vector<8x128xf32>
    %cst_6 = arith.constant 0.00999999977 : f32
    %8 = vector.broadcast %cst_6 : f32 to vector<8x128xf32>
    %9 = arith.mulf %8, %5 : vector<8x128xf32>
    %10 = arith.select %7, %5, %9 : vector<8x128xi1>, vector<8x128xf32>
    %c0_7 = arith.constant 0 : index
    %c0_8 = arith.constant 0 : index
    %11 = vector.load %arg4[%c0_7, %c0_8] : memref<8x128xf32, #tpu.memory_space<vmem>>, vector<8x128xf32>
    tpu.vector_store %arg4[%c0_7, %c0_8], %10 {strides = array<i32>} : memref<8x128xf32, #tpu.memory_space<vmem>>, vector<8x128xf32>,
    return
  }
  func.func @transform_0(%arg0: i32) -> (i32, i32) {
    %c0_i32 = arith.constant 0 : i32
    %c0_i32_0 = arith.constant 0 : i32
    return %arg0, %c0_i32 : i32, i32
  }
  func.func @transform_1(%arg0: i32) -> (i32, i32) {
    %c0_i32 = arith.constant 0 : i32
    %c0_i32_0 = arith.constant 0 : i32
    %c0_i32_1 = arith.constant 0 : i32
    return %c0_i32, %c0_i32_0 : i32, i32
  }
  func.func @transform_2(%arg0: i32) -> (i32, i32) {
    %c0_i32 = arith.constant 0 : i32
    %c0_i32_0 = arith.constant 0 : i32
    %c0_i32_1 = arith.constant 0 : i32
    return %c0_i32, %c0_i32_0 : i32, i32
  }
  func.func @transform_3(%arg0: i32) -> (i32, i32) {
    %c0_i32 = arith.constant 0 : i32
    %c0_i32_0 = arith.constant 0 : i32
    return %arg0, %c0_i32 : i32, i32
  }
}

</mosaic_0001>

<llo_original>
// kernel: tpu_custom_call.1
$region0: #{tpu_custom_call.1}
  #allocation0 [shape = 'u32[]', space=smem, size = 0x4, offset = 0x4, fixed_abs, tag = 'smem constant byte address 0x4 - core index']
  #allocation1 [shape = 'u32[144,128]{1,0:T(1,128)}', space=vmem, size = 0x12000, scoped, tag = 'internal scratch']
  %s0 = inlined_call_operand.hbm [shape: f32[8,32], index: 0, kind: input, shape index: {}]
  %s1 = inlined_call_operand.hbm [shape: f32[32,128], index: 1, kind: input, shape index: {}]
  %s2 = inlined_call_operand.vmem [shape: f32[1,128], index: 2, kind: input, shape index: {}]
  %s3 = inlined_call_operand.hbm [shape: f32[8,128], index: 3, kind: output, shape index: {}]
  %s4 = sld [smem:[#allocation0]]
  $region30: #{tpu_custom_call.1} parent=0
    _
  %s6 = ssub.s32 1, %s4
  %s7 = scalar_select 0, %s6, %s4
  $region1: #{tpu_custom_call.1} parent=0
    #allocation2 [shape = 'u8[4096]{0}', space=vmem, size = 0x1000, scoped, tag = 'input window, operand 0, single buffered']
    #allocation3 [shape = 's32[1]{0}', space=sflag, size = 0x4, scoped, tag = 'scoped memory for tpu_custom_call.1']
    #allocation4 [shape = 's32[1]{0}', space=sflag, size = 0x4, scoped, tag = 'scoped memory for tpu_custom_call.1']
    #allocation5 [shape = 'u8[16384]{0}', space=vmem, size = 0x4000, scoped, tag = 'input window, operand 1, single buffered']
    #allocation6 [shape = 's32[1]{0}', space=sflag, size = 0x4, scoped, tag = 'scoped memory for tpu_custom_call.1']
    #allocation7 [shape = 'u8[4096]{0}', space=vmem, size = 0x1000, scoped, tag = 'output window, operand 0, single buffered']
    %8 = vsyncpa [#allocation3], 0
    %9 = vsyncpa [#allocation6], 0
    %10 = vsyncpa [#allocation4], 0
    // Predicated region
    $region2: #{tpu_custom_call.1} parent=1 // pred_check
      _
    $region3: #{tpu_custom_call.1} parent=1 // pred_check_branch
      %12 = sbr.rel (0) target = $region5
    $region4: #{tpu_custom_call.1} parent=1 // pred_region
      %s14 = ssub.s32 128, 128
      %15 = vsyncadd [#allocation3], %s14
      %s17 = sshll.u32 [#allocation2], 4
      %s18 = int_to_ptr.vmem [resolvable:$true] %s17
      %20 = dma.hbm_to_vmem [thread:$0]  %s0, 128, %s18, [#allocation3]
    $region5: #{tpu_custom_call.1} parent=1 // pred_fallthru
      _
    // Predicated region
    $region6: #{tpu_custom_call.1} parent=1 // pred_check
      _
    $region7: #{tpu_custom_call.1} parent=1 // pred_check_branch
      %22 = sbr.rel (0) target = $region9
    $region8: #{tpu_custom_call.1} parent=1 // pred_region
      %s24 = ssub.s32 512, 512
      %25 = vsyncadd [#allocation6], %s24
      %s26 = sshll.u32 [#allocation5], 4
      %s27 = int_to_ptr.vmem [resolvable:$true] %s26
      %32 = dma.hbm_to_vmem [thread:$0]  %s1, 512, %s27, [#allocation6], 128, 128, 8
    $region9: #{tpu_custom_call.1} parent=1 // pred_fallthru
      _
    // Predicated region
    $region10: #{tpu_custom_call.1} parent=1 // pred_check
      _
    $region11: #{tpu_custom_call.1} parent=1 // pred_check_branch
      %34 = sbr.rel (0) target = $region13
    $region12: #{tpu_custom_call.1} parent=1 // pred_region
      _
    $region13: #{tpu_custom_call.1} parent=1 // pred_fallthru
      _
    // Predicated region
    $region14: #{tpu_custom_call.1} parent=1 // pred_check
      _
    $region15: #{tpu_custom_call.1} parent=1 // pred_check_branch
      %36 = sbr.rel (0) target = $region17
    $region16: #{tpu_custom_call.1} parent=1 // pred_region
      %37 = dma.done [#allocation3], 128
    $region17: #{tpu_custom_call.1} parent=1 // pred_fallthru
      _
    // Predicated region
    $region18: #{tpu_custom_call.1} parent=1 // pred_check
      _
    $region19: #{tpu_custom_call.1} parent=1 // pred_check_branch
      %39 = sbr.rel (0) target = $region21
    $region20: #{tpu_custom_call.1} parent=1 // pred_region
      %40 = dma.done [#allocation6], 512
    $region21: #{tpu_custom_call.1} parent=1 // pred_fallthru
      _
    %v41 = vld [vmem:[#allocation2] sm:$0xff]
    %v42 = vld [vmem:[#allocation5] sm:$0xff]
    %v43 = vld [vmem:[#allocation5 + $0x8] sm:$0xff]
    %v44 = vld [vmem:[#allocation5 + $0x10] sm:$0xff]
    %v45 = vld [vmem:[#allocation5 + $0x18] sm:$0xff]
    %v46 = vld [vmem:[%s2] sm:$0x1]
    %v48 = vlaneseq
    %v49 = vshrl.u32 %v48, 7
    %v50 = vsub.s32 0, %v49
    %v51 = vrot.slane %v46, %v50
    %vm53 = vcmask 261120
    %v55 = vsel %vm53, %v41, 0
    %57 = vmatprep.subr.mxu0 0.0
    %58 = vmatpush1.msra.mxu0 %v42
    %59 = vmatprep.subr.mxu0 0.0
    %60 = vmatpush1.msra.mxu0 %v43
    %61 = vmatprep.subr.mxu0 0.0
    %62 = vmatpush1.msra.mxu0 %v44
    %63 = vmatprep.subr.mxu0 0.0
    %64 = vmatpush1.msra.mxu0 %v45
    %65 = vmatprep.subr.mxu0 0.0
    %66 = vmatpush1.msra.mxu0 0.0
    %67 = vmatprep.subr.mxu0 0.0
    %68 = vmatpush1.msra.mxu0 0.0
    %69 = vmatprep.subr.mxu0 0.0
    %70 = vmatpush1.msra.mxu0 0.0
    %71 = vmatprep.subr.mxu0 0.0
    %72 = vmatpush1.msra.mxu0 0.0
    %73 = vmatprep.subr.mxu0 0.0
    %74 = vmatpush1.msra.mxu0 0.0
    %75 = vmatprep.subr.mxu0 0.0
    %76 = vmatpush1.msra.mxu0 0.0
    %77 = vmatprep.subr.mxu0 0.0
    %78 = vmatpush1.msra.mxu0 0.0
    %79 = vmatprep.subr.mxu0 0.0
    %80 = vmatpush1.msra.mxu0 0.0
    %81 = vmatprep.subr.mxu0 0.0
    %82 = vmatpush1.msra.mxu0 0.0
    %83 = vmatprep.subr.mxu0 0.0
    %84 = vmatpush1.msra.mxu0 0.0
    %85 = vmatprep.subr.mxu0 0.0
    %86 = vmatpush1.msra.mxu0 0.0
    %87 = vmatprep.subr.mxu0 0.0
    %88 = vmatpush1.msra.mxu0 0.0
    %89 = vmatprep.subr.mxu0 0.0
    %90 = vmatpush1.msra.mxu0 0.0
    %91 = vmatprep.subr.mxu0 0.0
    %92 = vmatpush1.msra.mxu0 0.0
    %93 = vmatprep.subr.mxu0 0.0
    %94 = vmatpush1.msra.mxu0 0.0
    %95 = vmatprep.subr.mxu0 0.0
    %96 = vmatpush1.msra.mxu0 0.0
    %97 = vmatprep.subr.mxu0 0.0
    %98 = vmatpush1.msra.mxu0 0.0
    %99 = vmatprep.subr.mxu0 0.0
    %100 = vmatpush1.msra.mxu0 0.0
    %101 = vmatprep.subr.mxu0 0.0
    %102 = vmatpush1.msra.mxu0 0.0
    %103 = vmatprep.subr.mxu0 0.0
    %104 = vmatpush1.msra.mxu0 0.0
    %105 = vmatprep.subr.mxu0 0.0
    %106 = vmatpush1.msra.mxu0 0.0
    %107 = vmatprep.subr.mxu0 0.0
    %108 = vmatpush1.msra.mxu0 0.0
    %109 = vmatprep.subr.mxu0 0.0
    %110 = vmatpush1.msra.mxu0 0.0
    %111 = vmatprep.subr.mxu0 0.0
    %112 = vmatpush1.msra.mxu0 0.0
    %113 = vmatprep.subr.mxu0 0.0
    %114 = vmatpush1.msra.mxu0 0.0
    %115 = vmatprep.subr.mxu0 0.0
    %116 = vmatpush1.msra.mxu0 0.0
    %117 = vmatprep.subr.mxu0 0.0
    %118 = vmatpush1.msra.mxu0 0.0
    %119 = vmatprep.subr.mxu0 0.0
    %120 = vmatpush1.msra.mxu0 0.0
    %121 = vmatprep.mubr.f32.mxu0 0.0
    %122 = vmatmul.mubr.f32.gmra.mrb[0].mxu0 %v55
    %v123 = vpop.f32.mrb[0].mxu0
    %v124 = vadd.f32 %v51, %v123
    %v125 = vpop.f32.mrb[0].mxu0
    %126 = vdwg.mxu0
    %vm127 = vcmp.ge.f32.partialorder %v124, 0.0
    %v128 = vmul.f32 %v124, 0.01
    %v129 = vsel %vm127, %v124, %v128
    %130 = vst [vmem:[#allocation7] sm:$0xff] %v129
    // Predicated region
    $region22: #{tpu_custom_call.1} parent=1 // pred_check
      _
    $region23: #{tpu_custom_call.1} parent=1 // pred_check_branch
      %132 = sbr.rel (0) target = $region25
    $region24: #{tpu_custom_call.1} parent=1 // pred_region
      %s134 = ssub.s32 128, 128
      %135 = vsyncadd [#allocation4], %s134
      %s137 = sshll.u32 [#allocation7], 4
      %s138 = int_to_ptr.vmem [resolvable:$true] %s137
      %140 = dma.vmem_to_hbm [thread:$0]  %s138, 128, %s3, [#allocation4]
    $region25: #{tpu_custom_call.1} parent=1 // pred_fallthru
      _
    // Predicated region
    $region26: #{tpu_custom_call.1} parent=1 // pred_check
      _
    $region27: #{tpu_custom_call.1} parent=1 // pred_check_branch
      %142 = sbr.rel (0) target = $region29
    $region28: #{tpu_custom_call.1} parent=1 // pred_region
      %143 = dma.done [#allocation4], 128
    $region29: #{tpu_custom_call.1} parent=1 // pred_fallthru
      _
    %144 = vsyncpa [#allocation3], 1
    %145 = vsyncpa [#allocation6], 1
    %146 = vsyncpa [#allocation4], 1

</llo_original>
